<compile_context>
chip_gen: v5e
topology: v5e:2x2
jax: 0.10.0
libtpu: 0.0.40
codegen_flags: <defaults>
</compile_context>

<pallas_src>
import functools

import jax
import jax.numpy as jnp
from jax.experimental import pallas as pl
from jax.experimental.pallas import tpu as pltpu

_LANE = 128
_SUBLANE = 8


def _round_up(x: int, m: int) -> int:
    return (x + m - 1) // m * m


def _cdiv(x: int, m: int) -> int:
    return (x + m - 1) // m


def _kl_div_kernel(pred_ref, target_ref, out_ref, *, eps, n_rows, block_rows,
                   fold_lanes):
    """One (tr, D) input block -> one small lane-dense partial-sum block."""
    p = pred_ref[...].astype(jnp.float32)
    t = target_ref[...].astype(jnp.float32)
    tr, d = p.shape

    # Mask rows past the true batch size in the (possibly partial) tail block.
    # Zeroing `t` forces q == 0 there, so the where() below zeroes those terms;
    # garbage in `p` only feeds per-row quantities of rows that are already
    # masked, so it never contaminates valid rows.
    if n_rows % block_rows != 0:
        row0 = pl.program_id(0) * block_rows
        rows = row0 + jax.lax.broadcasted_iota(jnp.int32, (tr, 1), 0)
        t = jnp.where(rows < n_rows, t, 0.0)

    p_sum = jnp.sum(p, axis=1, keepdims=True)          # (tr, 1)
    t_sum = jnp.sum(t, axis=1, keepdims=True)          # (tr, 1)

    # xlogy(q, q) - q*log_p == q * (log(t) - log(p) + c) for q > 0, with
    #   q = t * (1/(t_sum+eps)),  c = log(p_sum+eps) - log(t_sum+eps)
    # -> divide-free, two EUP logs per element, one broadcast add.
    c = jnp.log(p_sum + eps) - jnp.log(t_sum + eps)    # (tr, 1) per-row const
    q = t * (1.0 / (t_sum + eps))                      # (tr, d)

    # The where() also zeroes masked/padded rows (q == 0 there), so garbage
    # never produces NaN/Inf contributions in the forward pass.
    term = jnp.where(q > 0.0, q * (jnp.log(t) - jnp.log(p) + c), 0.0)

    # Row fold (layout-preserving reshape -> pure VPU adds): (tr, d) -> (8, d).
    part = jnp.sum(term.reshape(tr // _SUBLANE, _SUBLANE, d), axis=0)

    if fold_lanes:
        # Lane fold to a single (8, 128) vreg with static, tile-aligned slices:
        # one vreg add per 128-lane chunk, no XLU, unmasked lane-dense store.
        acc = part[:, 0:_LANE]
        for j in range(1, d // _LANE):
            acc = acc + part[:, j * _LANE:(j + 1) * _LANE]
        out_ref[...] = acc
    else:
        out_ref[...] = part


def kl_div_loss(pred: jax.Array, target: jax.Array, eps: float = 1e-8) -> jax.Array:
    if pred.shape != target.shape:
        raise ValueError(
            f"Predictions and targets must have the same shape, got "
            f"{pred.shape} and {target.shape}"
        )
    if pred.ndim == 4:
        b, s, h, w = pred.shape
        n, d = b * s, h * w
    elif pred.ndim == 3:
        b, h, w = pred.shape
        n, d = b, h * w
    else:
        raise ValueError(f"Expected 3D or 4D input, got {pred.ndim}D")

    pred2d = pred.reshape(n, d)
    target2d = target.reshape(n, d)

    # --- tiling: no XLA-side padding; full-D blocks + in-kernel row mask -----
    itemsize = jnp.dtype(pred2d.dtype).itemsize
    # Sub-32-bit inputs pack along sublanes: keep the row tile a multiple of
    # the packed tile height (8 for f32, 16 for bf16, 32 for int8/fp8).
    row_align = _SUBLANE * max(1, 4 // max(1, itemsize))

    # ~4 MiB of f32 working set per block (see header). A single row must fit;
    # for astronomically wide D the block degenerates to `row_align` rows.
    block_f32_bytes = 4 * 1024 * 1024
    tr_budget = max(row_align,
                    (block_f32_bytes // (d * 4)) // row_align * row_align)

    if n > row_align:
        # Keep >= 2 grid steps so v7x can shard the parallel axis over both TCs.
        tr = min(tr_budget, _round_up(_cdiv(n, 2), row_align))
    else:
        tr = row_align
    num_blocks = _cdiv(n, tr)

    fold_lanes = (d % _LANE == 0)
    lane_width = _LANE if fold_lanes else d

    kernel = functools.partial(
        _kl_div_kernel, eps=float(eps), n_rows=n, block_rows=tr,
        fold_lanes=fold_lanes)

    partials = pl.pallas_call(
        kernel,
        out_shape=jax.ShapeDtypeStruct((num_blocks * _SUBLANE, lane_width),
                                       jnp.float32),
        grid_spec=pltpu.PrefetchScalarGridSpec(
            num_scalar_prefetch=0,
            grid=(num_blocks,),
            in_specs=[
                pl.BlockSpec((tr, d), lambda i: (i, 0)),
                pl.BlockSpec((tr, d), lambda i: (i, 0)),
            ],
            out_specs=pl.BlockSpec((_SUBLANE, lane_width), lambda i: (i, 0)),
        ),
        compiler_params=pltpu.CompilerParams(
            dimension_semantics=("parallel",),      # independent blocks
            vmem_limit_bytes=48 * 1024 * 1024,
        ),
    )(pred2d, target2d)

    # Tiny final reduction + batchmean normalization with the *true* N.
    return jnp.sum(partials) / jnp.float32(n)


def _reference(pred, target, eps=1e-8):
    if pred.ndim == 4:
        n = pred.shape[0] * pred.shape[1]
    else:
        n = pred.shape[0]
    d = pred.shape[-1] * pred.shape[-2]
    p = pred.reshape(n, d).astype(jnp.float32)
    t = target.reshape(n, d).astype(jnp.float32)
    log_p = jnp.log(p / (jnp.sum(p, axis=1, keepdims=True) + eps))
    q = t / (jnp.sum(t, axis=1, keepdims=True) + eps)
    q_log_q = jnp.where(q > 0.0, q * jnp.log(q), 0.0)
    return jnp.sum(q_log_q - q * log_p) / n


if __name__ == "__main__":
    key = jax.random.PRNGKey(0)
    k1, k2, k3, k4, k5, k6, k7, k8 = jax.random.split(key, 8)

    # Case 1: aligned 4D input (B, S, H, W) = (2, 4, 16, 16) -> lane-folded path.
    p1 = jax.random.uniform(k1, (2, 4, 16, 16), jnp.float32, 0.05, 1.0)
    t1 = jax.random.uniform(k2, (2, 4, 16, 16), jnp.float32, 0.05, 1.0)
    l1 = kl_div_loss(p1, t1)
    jax.block_until_ready(l1)
    r1 = _reference(p1, t1)
    assert jnp.allclose(l1, r1, atol=1e-5, rtol=1e-5), (l1, r1)

    # Case 2: ragged 3D input (B, H, W) = (3, 15, 15) -> full-D block + in-kernel
    # row masking, no XLA-side padding anywhere.
    p2 = jax.random.uniform(k3, (3, 15, 15), jnp.float32, 0.05, 1.0)
    t2 = jax.random.uniform(k4, (3, 15, 15), jnp.float32, 0.05, 1.0)
    l2 = kl_div_loss(p2, t2)
    jax.block_until_ready(l2)
    r2 = _reference(p2, t2)
    assert jnp.allclose(l2, r2, atol=1e-5, rtol=1e-5), (l2, r2)

    # Case 3: multi-block grid (N=15, tr=8) with a partial, masked tail block.
    p3 = jax.random.uniform(k5, (5, 3, 16, 16), jnp.float32, 0.05, 1.0)
    t3 = jax.random.uniform(k6, (5, 3, 16, 16), jnp.float32, 0.05, 1.0)
    l3 = kl_div_loss(p3, t3)
    jax.block_until_ready(l3)
    r3 = _reference(p3, t3)
    assert jnp.allclose(l3, r3, atol=1e-5, rtol=1e-5), (l3, r3)

    # Case 4: bf16 inputs pass through un-upcast (half the HBM bytes moved);
    # compute is still f32 inside the kernel.
    p4 = jax.random.uniform(k7, (4, 4, 16, 16), jnp.float32, 0.05, 1.0).astype(jnp.bfloat16)
    t4 = jax.random.uniform(k8, (4, 4, 16, 16), jnp.float32, 0.05, 1.0).astype(jnp.bfloat16)
    l4 = kl_div_loss(p4, t4)
    jax.block_until_ready(l4)
    r4 = _reference(p4, t4)
    assert jnp.allclose(l4, r4, atol=1e-4, rtol=1e-4), (l4, r4)

    print("KERNEL_OK")
</pallas_src>

<mosaic_0001>
module attributes {stable_mosaic.version = 11 : i64} {
  func.func @_kl_div_kernel(%arg0: i32, %arg1: memref<8x256xf32, #tpu.memory_space<vmem>>, %arg2: memref<8x256xf32, #tpu.memory_space<vmem>>, %arg3: memref<8x128xf32, #tpu.memory_space<vmem>>) attributes {dimension_semantics = [#tpu.dimension_semantics<parallel>], iteration_bounds = array<i64: 1>, scalar_prefetch = 0 : i64, scratch_operands = 0 : i64, tpu.core_type = #tpu.core_type<tc>, window_params = [{transform_indices = @transform_0, window_bounds = array<i64: 8, 256>}, {transform_indices = @transform_1, window_bounds = array<i64: 8, 256>}, {transform_indices = @transform_2, window_bounds = array<i64: 8, 128>}]} {
    %c0 = arith.constant 0 : index
    %c0_0 = arith.constant 0 : index
    %0 = vector.load %arg1[%c0, %c0_0] : memref<8x256xf32, #tpu.memory_space<vmem>>, vector<8x256xf32>
    %c0_1 = arith.constant 0 : index
    %c0_2 = arith.constant 0 : index
    %1 = vector.load %arg2[%c0_1, %c0_2] : memref<8x256xf32, #tpu.memory_space<vmem>>, vector<8x256xf32>
    %cst = arith.constant dense<0.000000e+00> : vector<8xf32>
    %2 = vector.multi_reduction <add>, %0, %cst [1] : vector<8x256xf32> to vector<8xf32>
    %3 = vector.shape_cast %2 : vector<8xf32> to vector<8x1xf32>
    %cst_3 = arith.constant dense<0.000000e+00> : vector<8xf32>
    %4 = vector.multi_reduction <add>, %1, %cst_3 [1] : vector<8x256xf32> to vector<8xf32>
    %5 = vector.shape_cast %4 : vector<8xf32> to vector<8x1xf32>
    %cst_4 = arith.constant 9.99999993E-9 : f32
    %6 = vector.broadcast %cst_4 : f32 to vector<8x1xf32>
    %7 = arith.addf %3, %6 : vector<8x1xf32>
    %8 = math.log %7 : vector<8x1xf32>
    %cst_5 = arith.constant 9.99999993E-9 : f32
    %9 = vector.broadcast %cst_5 : f32 to vector<8x1xf32>
    %10 = arith.addf %5, %9 : vector<8x1xf32>
    %11 = math.log %10 : vector<8x1xf32>
    %12 = arith.subf %8, %11 : vector<8x1xf32>
    %cst_6 = arith.constant 9.99999993E-9 : f32
    %13 = vector.broadcast %cst_6 : f32 to vector<8x1xf32>
    %14 = arith.addf %5, %13 : vector<8x1xf32>
    %cst_7 = arith.constant 1.000000e+00 : f32
    %15 = vector.broadcast %cst_7 : f32 to vector<8x1xf32>
    %16 = arith.divf %15, %14 : vector<8x1xf32>
    %17 = vector.broadcast %16 : vector<8x1xf32> to vector<8x256xf32>
    %18 = arith.mulf %1, %17 : vector<8x256xf32>
    %cst_8 = arith.constant 0.000000e+00 : f32
    %19 = vector.broadcast %cst_8 : f32 to vector<8x256xf32>
    %20 = arith.cmpf ogt, %18, %19 : vector<8x256xf32>
    %21 = math.log %1 : vector<8x256xf32>
    %22 = math.log %0 : vector<8x256xf32>
    %23 = arith.subf %21, %22 : vector<8x256xf32>
    %24 = vector.broadcast %12 : vector<8x1xf32> to vector<8x256xf32>
    %25 = arith.addf %23, %24 : vector<8x256xf32>
    %26 = arith.mulf %18, %25 : vector<8x256xf32>
    %cst_9 = arith.constant 0.000000e+00 : f32
    %27 = vector.broadcast %cst_9 : f32 to vector<8x256xf32>
    %28 = arith.select %20, %26, %27 : vector<8x256xi1>, vector<8x256xf32>
    %29 = vector.shape_cast %28 : vector<8x256xf32> to vector<1x8x256xf32>
    %cst_10 = arith.constant dense<0.000000e+00> : vector<8x256xf32>
    %30 = vector.multi_reduction <add>, %29, %cst_10 [0] : vector<1x8x256xf32> to vector<8x256xf32>
    %31 = vector.extract_strided_slice %30 {offsets = [0, 0], sizes = [8, 128], strides = [1, 1]} : vector<8x256xf32> to vector<8x128xf32>
    %32 = vector.extract_strided_slice %30 {offsets = [0, 128], sizes = [8, 128], strides = [1, 1]} : vector<8x256xf32> to vector<8x128xf32>
    %33 = arith.addf %31, %32 : vector<8x128xf32>
    %c0_11 = arith.constant 0 : index
    %c0_12 = arith.constant 0 : index
    %34 = vector.load %arg3[%c0_11, %c0_12] : memref<8x128xf32, #tpu.memory_space<vmem>>, vector<8x128xf32>
    tpu.vector_store %arg3[%c0_11, %c0_12], %33 {strides = array<i32>} : memref<8x128xf32, #tpu.memory_space<vmem>>, vector<8x128xf32>,
    return
  }
  func.func @transform_0(%arg0: i32) -> (i32, i32) {
    %c0_i32 = arith.constant 0 : i32
    %c0_i32_0 = arith.constant 0 : i32
    return %arg0, %c0_i32 : i32, i32
  }
  func.func @transform_1(%arg0: i32) -> (i32, i32) {
    %c0_i32 = arith.constant 0 : i32
    %c0_i32_0 = arith.constant 0 : i32
    return %arg0, %c0_i32 : i32, i32
  }
  func.func @transform_2(%arg0: i32) -> (i32, i32) {
    %c0_i32 = arith.constant 0 : i32
    %c0_i32_0 = arith.constant 0 : i32
    return %arg0, %c0_i32 : i32, i32
  }
}

</mosaic_0001>

<llo_original>
// kernel: tpu_custom_call.1
$region0: #{tpu_custom_call.1}
  #allocation0 [shape = 'u32[]', space=smem, size = 0x4, offset = 0x4, fixed_abs, tag = 'smem constant byte address 0x4 - core index']
  #allocation1 [shape = 'u32[72,128]{1,0:T(1,128)}', space=vmem, size = 0x9000, scoped, tag = 'internal scratch']
  %s0 = inlined_call_operand.hbm [shape: f32[8,256], index: 0, kind: input, shape index: {}]
  %s1 = inlined_call_operand.hbm [shape: f32[8,256], index: 1, kind: input, shape index: {}]
  %s2 = inlined_call_operand.hbm [shape: f32[8,128], index: 2, kind: output, shape index: {}]
  %s3 = sld [smem:[#allocation0]]
  $region26: #{tpu_custom_call.1} parent=0
    _
  %s5 = ssub.s32 1, %s3
  %s6 = scalar_select 0, %s5, %s3
  $region1: #{tpu_custom_call.1} parent=0
    #allocation2 [shape = 'u8[8192]{0}', space=vmem, size = 0x2000, scoped, tag = 'input window, operand 0, single buffered']
    #allocation3 [shape = 's32[1]{0}', space=sflag, size = 0x4, scoped, tag = 'scoped memory for tpu_custom_call.1']
    #allocation4 [shape = 's32[1]{0}', space=sflag, size = 0x4, scoped, tag = 'scoped memory for tpu_custom_call.1']
    #allocation5 [shape = 'u8[8192]{0}', space=vmem, size = 0x2000, scoped, tag = 'input window, operand 1, single buffered']
    #allocation6 [shape = 's32[1]{0}', space=sflag, size = 0x4, scoped, tag = 'scoped memory for tpu_custom_call.1']
    #allocation7 [shape = 'u8[4096]{0}', space=vmem, size = 0x1000, scoped, tag = 'output window, operand 0, single buffered']
    %7 = vsyncpa [#allocation3], 0
    %8 = vsyncpa [#allocation6], 0
    %9 = vsyncpa [#allocation4], 0
    // Predicated region
    $region2: #{tpu_custom_call.1} parent=1 // pred_check
      _
    $region3: #{tpu_custom_call.1} parent=1 // pred_check_branch
      %11 = sbr.rel (0) target = $region5
    $region4: #{tpu_custom_call.1} parent=1 // pred_region
      %13 = vsyncadd [#allocation3], 0
      %s15 = sshll.u32 %s0, 4
      %s16 = int_to_ptr.hbm [resolvable:$true] %s15
      %s17 = sshll.u32 [#allocation2], 4
      %s18 = int_to_ptr.vmem [resolvable:$true] %s17
      %20 = dma.hbm_to_vmem [thread:$0]  %s16, 256, %s18, [#allocation3]
    $region5: #{tpu_custom_call.1} parent=1 // pred_fallthru
      _
    // Predicated region
    $region6: #{tpu_custom_call.1} parent=1 // pred_check
      _
    $region7: #{tpu_custom_call.1} parent=1 // pred_check_branch
      %22 = sbr.rel (0) target = $region9
    $region8: #{tpu_custom_call.1} parent=1 // pred_region
      %24 = vsyncadd [#allocation6], 0
      %s26 = sshll.u32 %s1, 4
      %s27 = int_to_ptr.hbm [resolvable:$true] %s26
      %s28 = sshll.u32 [#allocation5], 4
      %s29 = int_to_ptr.vmem [resolvable:$true] %s28
      %31 = dma.hbm_to_vmem [thread:$0]  %s27, 256, %s29, [#allocation6]
    $region9: #{tpu_custom_call.1} parent=1 // pred_fallthru
      _
    // Predicated region
    $region10: #{tpu_custom_call.1} parent=1 // pred_check
      _
    $region11: #{tpu_custom_call.1} parent=1 // pred_check_branch
      %33 = sbr.rel (0) target = $region13
    $region12: #{tpu_custom_call.1} parent=1 // pred_region
      %35 = dma.done [#allocation3], 256
    $region13: #{tpu_custom_call.1} parent=1 // pred_fallthru
      _
    // Predicated region
    $region14: #{tpu_custom_call.1} parent=1 // pred_check
      _
    $region15: #{tpu_custom_call.1} parent=1 // pred_check_branch
      %37 = sbr.rel (0) target = $region17
    $region16: #{tpu_custom_call.1} parent=1 // pred_region
      %39 = dma.done [#allocation6], 256
    $region17: #{tpu_custom_call.1} parent=1 // pred_fallthru
      _
    %v40 = vld [vmem:[#allocation2] sm:$0xff]
    %v41 = vld [vmem:[#allocation2 + $0x8] sm:$0xff]
    %v42 = vld [vmem:[#allocation5] sm:$0xff]
    %v43 = vld [vmem:[#allocation5 + $0x8] sm:$0xff]
    %v44 = vadd.f32 %v40, %v41
    %45 = vadd.xlane.f32.xlu0 %v44
    %v46 = vpop.xlane.xlu0 %45
    %v47 = vadd.f32 %v42, %v43
    %48 = vadd.xlane.f32.xlu0 %v47
    %v49 = vpop.xlane.xlu0 %48
    %v50 = vadd.f32 %v46, 1e-08
    %v51 = vlog2.pop %v50
    %v52 = vmul.f32 %v51, 0.6931472
    %v53 = vadd.f32 %v49, 1e-08
    %v54 = vlog2.pop %v53
    %v55 = vmul.f32 %v54, 0.6931472
    %v56 = vsub.f32 %v52, %v55
    %v57 = vrcp.pop %v53
    %v58 = vmul.f32 %v53, %v57
    %v59 = vsub.f32 1.0, %v58
    %v60 = vmul.f32 %v57, %v59
    %v61 = vadd.f32 %v57, %v60
    %vm62 = vweird.f32 %v53
    %vm63 = vweird.f32 %v57
    %vm64 = vmor %vm62, %vm63
    %v65 = vsel %vm64, %v57, %v61
    %v66 = vand.u32 2147483647, %v53
    %vm67 = vcmp.eq.f32.partialorder %v66, 8.507059e+37
    %v68 = vand.u32 %v53, 2147483648
    %v69 = vor.u32 1.1754944e-38, %v68
    %v70 = vsel %vm67, %v69, %v65
    %v71 = vmul.f32 1.0, %v70
    %v72 = vmul.f32 %v42, %v71
    %v73 = vmul.f32 %v43, %v71
    %vm74 = vcmp.gt.f32.partialorder %v72, 0.0
    %vm75 = vcmp.gt.f32.partialorder %v73, 0.0
    %v76 = vlog2.pop %v42
    %v77 = vmul.f32 %v76, 0.6931472
    %v78 = vlog2.pop %v43
    %v79 = vmul.f32 %v78, 0.6931472
    %v80 = vlog2.pop %v40
    %v81 = vmul.f32 %v80, 0.6931472
    %v82 = vlog2.pop %v41
    %v83 = vmul.f32 %v82, 0.6931472
    %v84 = vsub.f32 %v77, %v81
    %v85 = vsub.f32 %v79, %v83
    %v86 = vadd.f32 %v84, %v56
    %v87 = vadd.f32 %v85, %v56
    %v88 = vmul.f32 %v72, %v86
    %v89 = vmul.f32 %v73, %v87
    %v90 = vsel %vm74, %v88, 0.0
    %v91 = vsel %vm75, %v89, 0.0
    %v92 = vadd.f32 %v90, 0.0
    %v93 = vadd.f32 %v91, 0.0
    %v94 = vadd.f32 %v92, %v93
    %95 = vst [vmem:[#allocation7] sm:$0xff] %v94
    // Predicated region
    $region18: #{tpu_custom_call.1} parent=1 // pred_check
      _
    $region19: #{tpu_custom_call.1} parent=1 // pred_check_branch
      %97 = sbr.rel (0) target = $region21
    $region20: #{tpu_custom_call.1} parent=1 // pred_region
      %99 = vsyncadd [#allocation4], 0
      %s101 = sshll.u32 [#allocation7], 4
      %s102 = int_to_ptr.vmem [resolvable:$true] %s101
      %s103 = sshll.u32 %s2, 4
      %s104 = int_to_ptr.hbm [resolvable:$true] %s103
      %106 = dma.vmem_to_hbm [thread:$0]  %s102, 128, %s104, [#allocation4]
    $region21: #{tpu_custom_call.1} parent=1 // pred_fallthru
      _
    // Predicated region
    $region22: #{tpu_custom_call.1} parent=1 // pred_check
      _
    $region23: #{tpu_custom_call.1} parent=1 // pred_check_branch
      %108 = sbr.rel (0) target = $region25
    $region24: #{tpu_custom_call.1} parent=1 // pred_region
      %110 = dma.done [#allocation4], 128
    $region25: #{tpu_custom_call.1} parent=1 // pred_fallthru
      _
    %111 = vsyncpa [#allocation3], 1
    %112 = vsyncpa [#allocation6], 1
    %113 = vsyncpa [#allocation4], 1

</llo_original>
